<compile_context>
chip_gen: v6e
topology: v6e:2x2x1
jax: 0.10.0
libtpu: 0.0.40
codegen_flags: <defaults>
</compile_context>

<pallas_src>
import functools

import jax
import jax.numpy as jnp
from jax.experimental import pallas as pl
from jax.experimental.pallas import tpu as pltpu


def _round_up(a, b):
    return (a + b - 1) // b * b


def projector_kernel(x_ref, ids_ref, w_ref, tab_ref, o_ref, *, cr, n_chunks, vocab, pack):
    # x_ref:   (tnr, pack*F)   f32  `pack` node rows packed per (lane-dense) row
    # ids_ref: (tnr, pack)     i32
    # w_ref:   (pack*F, pack*H) f32 block-diagonal Linear weight
    # tab_ref: (pack*V, pack*H) f32 block-diagonal (embedding table + bias)
    # o_ref:   (tnr, pack*H)   f32  128-lane-dense when pack*H == 128
    rv = tab_ref.shape[0]  # pack * vocab

    def chunk(c, carry):
        row0 = pl.multiple_of(c * cr, cr)
        x_c = x_ref[pl.ds(row0, cr), :]        # (cr, pack*F)
        ids_c = ids_ref[pl.ds(row0, cr), :]    # (cr, pack)

        # Linear projection on the MXU; block-diagonal RHS keeps output 128-lane wide.
        lin = jnp.dot(x_c, w_ref[...], preferred_element_type=jnp.float32)

        # Embedding gather as a one-hot matmul on the otherwise-idle MXU.
        # Column block j (lanes [j*V, (j+1)*V)) holds one_hot(ids of packed slot j).
        iota = jax.lax.broadcasted_iota(jnp.int32, (cr, rv), 1)
        onehot = (iota == ids_c[:, 0:1]).astype(jnp.float32)
        for j in range(1, pack):
            onehot = onehot + (iota == ids_c[:, j:j + 1] + j * vocab).astype(jnp.float32)
        emb = jnp.dot(onehot, tab_ref[...], preferred_element_type=jnp.float32)

        o_ref[pl.ds(row0, cr), :] = lin + emb
        return carry

    # Unrolled: short fixed trip-count, keeps the one-hot slab in registers per chunk.
    jax.lax.fori_loop(0, n_chunks, chunk, None, unroll=True)


def _choose_tiles(nr, tnr_target, cr_target):
    """Pick (tile_rows, chunk_rows) in packed-row units.

    Guarantees chunk | tile, sublane-aligned sizes, and >=2 grid steps whenever the
    problem is splittable (keeps both v7x TensorCores busy; neutral on v5e/v6e).
    """
    if nr <= 8:
        return nr, nr
    half = _round_up(pl.cdiv(nr, 2), 8)
    tnr = min(_round_up(tnr_target, 8), half)
    cr = min(_round_up(cr_target, 8), tnr)
    tnr = _round_up(tnr, cr)
    return tnr, cr


def linear_projector(x, weight_fh, bias_h, emb_table, ids, *, tile_rows=2048, chunk_rows=256):
    """Pallas implementation of LinearProjector.forward.

    x:         [N, F] float32
    weight_fh: [F, H] float32   (transposed PyTorch Linear weight)
    bias_h:    [H]    float32
    emb_table: [V, H] float32
    ids:       [N]    int32/int64
    returns    [N, H] float32
    """
    N, F = x.shape
    V, H = emb_table.shape

    # Fold the Linear bias into the embedding table (each output row receives exactly
    # one embedding row, so the bias is added exactly once).
    table_b = emb_table + bias_h[None, :]                      # [V, H]
    ids = ids.astype(jnp.int32)

    # Lane-dense packing factor: `pack` node rows per 128-lane output row.
    pack = 128 // H if (H <= 128 and 128 % H == 0) else 1
    if pack > 1 and N % pack != 0:
        pack = 1  # TODO(synk): ragged-N lane packing needs a tail fixup; fall back.

    nr = N // pack
    x_v = x.reshape(nr, pack * F)                              # free row-major view
    ids_v = ids.reshape(nr, pack)
    eye = jnp.eye(pack, dtype=jnp.float32)
    w_rhs = jnp.kron(eye, weight_fh)                           # (pack*F, pack*H)
    tab_rhs = jnp.kron(eye, table_b)                           # (pack*V, pack*H)

    tnr, cr = _choose_tiles(nr, max(8, tile_rows // pack), max(8, chunk_rows // pack))
    n_chunks = tnr // cr
    grid = (pl.cdiv(nr, tnr),)    # ragged last tile handled by Pallas block clipping

    kernel = functools.partial(
        projector_kernel, cr=cr, n_chunks=n_chunks, vocab=V, pack=pack)

    cost = pl.CostEstimate(
        flops=2 * nr * (pack * F) * (pack * H) + 2 * nr * (pack * V) * (pack * H),
        transcendentals=0,
        bytes_accessed=(N * F + N + (pack * F) * (pack * H)
                        + (pack * V) * (pack * H) + N * H) * 4,
    )

    out_packed = pl.pallas_call(
        kernel,
        out_shape=jax.ShapeDtypeStruct((nr, pack * H), jnp.float32),
        grid=grid,
        in_specs=[
            pl.BlockSpec((tnr, pack * F), lambda i: (i, 0)),   # packed node features
            pl.BlockSpec((tnr, pack), lambda i: (i, 0)),       # packed node ids
            # Constant, VMEM-resident blocks (tiny at these shapes).
            pl.BlockSpec((pack * F, pack * H), lambda i: (0, 0)),
            pl.BlockSpec((pack * V, pack * H), lambda i: (0, 0)),
        ],
        out_specs=pl.BlockSpec((tnr, pack * H), lambda i: (i, 0)),
        compiler_params=pltpu.CompilerParams(
            dimension_semantics=("parallel",),
            vmem_limit_bytes=32 * 1024 * 1024,
        ),
        cost_estimate=cost,
    )(x_v, ids_v, w_rhs, tab_rhs)

    # Row-major contiguous: this reshape is layout-free (no extra HBM pass).
    return out_packed.reshape(N, H)


def xavier_uniform(key, shape):
    # matches nn.init.xavier_uniform_ (gain=1): U(-a, a), a = sqrt(6/(fan_in+fan_out))
    fan_in, fan_out = shape[1], shape[0]
    a = (6.0 / (fan_in + fan_out)) ** 0.5
    return jax.random.uniform(key, shape, jnp.float32, minval=-a, maxval=a)


if __name__ == "__main__":
    # Small shapes consistent with the module.
    N = 128          # number of nodes in the batch
    F = 16           # float-feature dim
    H = 32           # hidden_dims
    V = 40           # embedding vocab: data.max() + 2

    key = jax.random.PRNGKey(0)
    k_x, k_w, k_e, k_id = jax.random.split(key, 4)

    # Inputs (deterministic).
    x_feat = jax.random.normal(k_x, (N, F), jnp.float32)        # float32 2-D feature
    ids = jax.random.randint(k_id, (N,), 0, V - 1, jnp.int32)   # int64-style id feature

    # Parameters (deterministic, per __init__):
    #   nn.Linear(F, H): weight [H, F] xavier_uniform, bias zeros.
    w_hf = xavier_uniform(k_w, (H, F))          # PyTorch layout [H, F]
    w_fh = w_hf.T                               # kernel layout  [F, H]
    bias = jnp.zeros((H,), jnp.float32)
    #   nn.Embedding(V, H): weight [V, H] xavier_uniform.
    emb_table = xavier_uniform(k_e, (V, H))

    out = linear_projector(x_feat, w_fh, bias, emb_table, ids)
    out = jax.block_until_ready(out)

    # Reference check (plain JAX) — stack(proj, 1).sum(1) == linear + embedding.
    ref = x_feat @ w_fh + bias[None, :] + emb_table[ids]
    assert out.shape == (N, H)
    assert jnp.allclose(out, ref, atol=1e-5, rtol=1e-5)

    print("KERNEL_OK")
</pallas_src>

<mosaic_0001>
module attributes {stable_mosaic.version = 11 : i64} {
  func.func @projector_kernel(%arg0: i32, %arg1: memref<16x64xf32, #tpu.memory_space<vmem>>, %arg2: memref<16x4xi32, #tpu.memory_space<vmem>>, %arg3: memref<64x128xf32, #tpu.memory_space<vmem>>, %arg4: memref<160x128xf32, #tpu.memory_space<vmem>>, %arg5: memref<16x128xf32, #tpu.memory_space<vmem>>) attributes {dimension_semantics = [#tpu.dimension_semantics<parallel>], iteration_bounds = array<i64: 2>, scalar_prefetch = 0 : i64, scratch_operands = 0 : i64, tpu.core_type = #tpu.core_type<tc>, window_params = [{transform_indices = @transform_0, window_bounds = array<i64: 16, 64>}, {transform_indices = @transform_1, window_bounds = array<i64: 16, 4>}, {pipeline_mode = #tpu.pipeline_mode<synchronous>, transform_indices = @transform_2, window_bounds = array<i64: 64, 128>}, {pipeline_mode = #tpu.pipeline_mode<synchronous>, transform_indices = @transform_3, window_bounds = array<i64: 160, 128>}, {transform_indices = @transform_4, window_bounds = array<i64: 16, 128>}]} {
    %c0_i32 = arith.constant 0 : i32
    %c16_i32 = arith.constant 16 : i32
    %0 = arith.muli %c0_i32, %c16_i32 : i32
    %1 = tpu.assume_multiple %0, 16 : i32
    %2 = arith.index_cast %1 : i32 to index
    %c0 = arith.constant 0 : index
    %3 = vector.load %arg1[%2, %c0] : memref<16x64xf32, #tpu.memory_space<vmem>>, vector<16x64xf32>
    %4 = arith.index_cast %1 : i32 to index
    %c0_0 = arith.constant 0 : index
    %5 = vector.load %arg2[%4, %c0_0] : memref<16x4xi32, #tpu.memory_space<vmem>>, vector<16x4xi32>
    %c0_1 = arith.constant 0 : index
    %c0_2 = arith.constant 0 : index
    %6 = vector.load %arg3[%c0_1, %c0_2] : memref<64x128xf32, #tpu.memory_space<vmem>>, vector<64x128xf32>
    %cst = arith.constant dense<0.000000e+00> : vector<16x128xf32>
    %7 = tpu.matmul %3, %6, %cst {dimension_numbers = #tpu.dot_dimension_numbers<[1], [0], [0], [1], [0, 0, 1, 1], [], []>} : vector<16x64xf32>, vector<64x128xf32>, vector<16x128xf32> -> vector<16x128xf32>
    %8 = tpu.iota {dimensions = array<i32: 1>} : vector<16x160xi32>
    %9 = vector.extract_strided_slice %5 {offsets = [0, 0], sizes = [16, 1], strides = [1, 1]} : vector<16x4xi32> to vector<16x1xi32>
    %10 = vector.broadcast %9 : vector<16x1xi32> to vector<16x160xi32>
    %11 = arith.cmpi eq, %8, %10 : vector<16x160xi32>
    %12 = arith.extui %11 : vector<16x160xi1> to vector<16x160xi32>
    %13 = arith.sitofp %12 : vector<16x160xi32> to vector<16x160xf32>
    %14 = vector.extract_strided_slice %5 {offsets = [0, 1], sizes = [16, 1], strides = [1, 1]} : vector<16x4xi32> to vector<16x1xi32>
    %c40_i32 = arith.constant 40 : i32
    %15 = vector.broadcast %c40_i32 : i32 to vector<16x1xi32>
    %16 = arith.addi %14, %15 : vector<16x1xi32>
    %17 = vector.broadcast %16 : vector<16x1xi32> to vector<16x160xi32>
    %18 = arith.cmpi eq, %8, %17 : vector<16x160xi32>
    %19 = arith.extui %18 : vector<16x160xi1> to vector<16x160xi32>
    %20 = arith.sitofp %19 : vector<16x160xi32> to vector<16x160xf32>
    %21 = arith.addf %13, %20 : vector<16x160xf32>
    %22 = vector.extract_strided_slice %5 {offsets = [0, 2], sizes = [16, 1], strides = [1, 1]} : vector<16x4xi32> to vector<16x1xi32>
    %c80_i32 = arith.constant 80 : i32
    %23 = vector.broadcast %c80_i32 : i32 to vector<16x1xi32>
    %24 = arith.addi %22, %23 : vector<16x1xi32>
    %25 = vector.broadcast %24 : vector<16x1xi32> to vector<16x160xi32>
    %26 = arith.cmpi eq, %8, %25 : vector<16x160xi32>
    %27 = arith.extui %26 : vector<16x160xi1> to vector<16x160xi32>
    %28 = arith.sitofp %27 : vector<16x160xi32> to vector<16x160xf32>
    %29 = arith.addf %21, %28 : vector<16x160xf32>
    %30 = vector.extract_strided_slice %5 {offsets = [0, 3], sizes = [16, 1], strides = [1, 1]} : vector<16x4xi32> to vector<16x1xi32>
    %c120_i32 = arith.constant 120 : i32
    %31 = vector.broadcast %c120_i32 : i32 to vector<16x1xi32>
    %32 = arith.addi %30, %31 : vector<16x1xi32>
    %33 = vector.broadcast %32 : vector<16x1xi32> to vector<16x160xi32>
    %34 = arith.cmpi eq, %8, %33 : vector<16x160xi32>
    %35 = arith.extui %34 : vector<16x160xi1> to vector<16x160xi32>
    %36 = arith.sitofp %35 : vector<16x160xi32> to vector<16x160xf32>
    %37 = arith.addf %29, %36 : vector<16x160xf32>
    %c0_3 = arith.constant 0 : index
    %c0_4 = arith.constant 0 : index
    %38 = vector.load %arg4[%c0_3, %c0_4] : memref<160x128xf32, #tpu.memory_space<vmem>>, vector<160x128xf32>
    %cst_5 = arith.constant dense<0.000000e+00> : vector<16x128xf32>
    %39 = tpu.matmul %37, %38, %cst_5 {dimension_numbers = #tpu.dot_dimension_numbers<[1], [0], [0], [1], [0, 0, 1, 1], [], []>} : vector<16x160xf32>, vector<160x128xf32>, vector<16x128xf32> -> vector<16x128xf32>
    %40 = arith.addf %7, %39 : vector<16x128xf32>
    %41 = arith.index_cast %1 : i32 to index
    %c0_6 = arith.constant 0 : index
    %42 = vector.load %arg5[%41, %c0_6] : memref<16x128xf32, #tpu.memory_space<vmem>>, vector<16x128xf32>
    tpu.vector_store %arg5[%41, %c0_6], %40 {strides = array<i32>} : memref<16x128xf32, #tpu.memory_space<vmem>>, vector<16x128xf32>,
    %c1_i32 = arith.constant 1 : i32
    return
  }
  func.func @transform_0(%arg0: i32) -> (i32, i32) {
    %c0_i32 = arith.constant 0 : i32
    %c0_i32_0 = arith.constant 0 : i32
    return %arg0, %c0_i32 : i32, i32
  }
  func.func @transform_1(%arg0: i32) -> (i32, i32) {
    %c0_i32 = arith.constant 0 : i32
    %c0_i32_0 = arith.constant 0 : i32
    return %arg0, %c0_i32 : i32, i32
  }
  func.func @transform_2(%arg0: i32) -> (i32, i32) {
    %c0_i32 = arith.constant 0 : i32
    %c0_i32_0 = arith.constant 0 : i32
    %c0_i32_1 = arith.constant 0 : i32
    return %c0_i32, %c0_i32_0 : i32, i32
  }
  func.func @transform_3(%arg0: i32) -> (i32, i32) {
    %c0_i32 = arith.constant 0 : i32
    %c0_i32_0 = arith.constant 0 : i32
    %c0_i32_1 = arith.constant 0 : i32
    return %c0_i32, %c0_i32_0 : i32, i32
  }
  func.func @transform_4(%arg0: i32) -> (i32, i32) {
    %c0_i32 = arith.constant 0 : i32
    %c0_i32_0 = arith.constant 0 : i32
    return %arg0, %c0_i32 : i32, i32
  }
}

</mosaic_0001>

<llo_original>
// kernel: tpu_custom_call.1
$region0: #{tpu_custom_call.1}
  #allocation0 [shape = 'u32[]', space=smem, size = 0x4, offset = 0x4, fixed_abs, tag = 'smem constant byte address 0x4 - core index']
  #allocation1 [shape = 'u32[144,128]{1,0:T(1,128)}', space=vmem, size = 0x12000, scoped, tag = 'internal scratch']
  %s0 = inlined_call_operand.vmem [shape: f32[32,64], index: 0, kind: input, shape index: {}]
  %s1 = inlined_call_operand.vmem [shape: s32[32,4], index: 1, kind: input, shape index: {}]
  %s2 = inlined_call_operand.hbm [shape: f32[64,128], index: 2, kind: input, shape index: {}]
  %s3 = inlined_call_operand.hbm [shape: f32[160,128], index: 3, kind: input, shape index: {}]
  %s4 = inlined_call_operand.hbm [shape: f32[32,128], index: 4, kind: output, shape index: {}]
  %s5 = sld [smem:[#allocation0]]
  $region57: #{tpu_custom_call.1} parent=0
    _
  %s7 = ssub.s32 1, %s5
  %s8 = scalar_select 0, %s7, %s5
  $region1: #{tpu_custom_call.1} parent=0
    #allocation2 [shape = 'u8[32768]{0}', space=vmem, size = 0x8000, scoped, tag = 'input window, operand 2, single buffered']
    #allocation3 [shape = 's32[2]{0}', space=sflag, size = 0x8, scoped, tag = 'scoped memory for tpu_custom_call.1']
    #allocation4 [shape = 's32[2]{0}', space=sflag, size = 0x8, scoped, tag = 'scoped memory for tpu_custom_call.1']
    #allocation5 [shape = 'u8[81920]{0}', space=vmem, size = 0x14000, scoped, tag = 'input window, operand 3, single buffered']
    #allocation6 [shape = 's32[1]{0}', space=sflag, size = 0x4, scoped, tag = 'scoped memory for tpu_custom_call.1']
    #allocation7 [shape = 'u8[16384]{0}', space=vmem, size = 0x4000, scoped, tag = 'output window, operand 0']
    %9 = vsyncpa [#allocation3], 0
    %10 = vsyncpa [#allocation6], 0
    %11 = vsyncpa [#allocation4], 0
    %s12 = scalar_lea.sflag [#allocation4], 1
    %13 = vsyncpa %s12, 0
    loop: start=0, step=1, limit=4
    $region2: #{tpu_custom_call.1} parent=1 // loop_pre_header
      _
    $region3: #{tpu_custom_call.1} parent=1 // loop_header
      %s15 = sphi 0, %s19
      %p16 = scmp.ge.s32.totalorder %s15, 4
      %s25 = sphi 0, %s27
      %s28 = sphi 0, %s25
      %s29 = sphi 0, %s28
      %s45 = sphi 0, %s29
      %s51 = sphi 0, %s53
      %s54 = sphi 0, %s51
      %s55 = sphi 0, %s54
      %s71 = sphi 0, %s55
      %s75 = sphi 0, %s75
      %s77 = sphi 0, %s75
      %s78 = sphi 0, %s77
      %s92 = sphi 0, %s78
      %s96 = sphi 0, %s96
      %s98 = sphi 0, %s96
      %s99 = sphi 0, %s98
      %s113 = sphi 0, %s99
      %s119 = sphi 0, %s121
      %s122 = sphi 0, %s119
      %s123 = sphi 0, %s122
      %s139 = sphi 0, %s123
    $region4: #{tpu_custom_call.1} parent=1 // loop_header_branch
      %18 = sbr.rel (%p16) target = $region8
    $region5: #{tpu_custom_call.1} parent=1 // loop_body
      %s20 = ssub.s32 %s15, 1
      %s21 = ssub.s32 %s15, 2
      %s22 = sadd.s32 %s15, 1
      %s23 = ssub.s32 %s15, %s22
      %p24 = scmp.eq.s32.totalorder %s23, 0
      %s26 = sadd.s32 %s25, 1
      %s27 = scalar_select %p24, %s25, %s26
      %p30 = pneg %p24
      %p31 = scmp.eq.s32.totalorder %s15, 1
      %p32 = por %p30, %p31
      %p33 = scmp.ne.s32.totalorder %s25, %s28
      %p34 = scmp.eq.s32.totalorder %s15, 0
      %p35 = por %p33, %p34
      %p36 = scmp.ne.s32.totalorder %s25, %s28
      %p37 = scmp.eq.s32.totalorder %s20, 1
      %p38 = por %p36, %p37
      %p39 = scmp.ne.s32.totalorder %s28, %s29
      %p40 = scmp.eq.s32.totalorder %s20, 0
      %p41 = por %p39, %p40
      %p42 = scmp.ne.s32.totalorder %s28, %s29
      %p43 = scmp.eq.s32.totalorder %s21, 1
      %p44 = por %p42, %p43
      %p46 = scmp.ne.s32.totalorder %s29, %s45
      %p47 = scmp.eq.s32.totalorder %s21, 0
      %p48 = por %p46, %p47
      %s49 = ssub.s32 %s15, %s22
      %p50 = scmp.eq.s32.totalorder %s49, 0
      %s52 = sadd.s32 %s51, 1
      %s53 = scalar_select %p50, %s51, %s52
      %p56 = pneg %p50
      %p57 = scmp.eq.s32.totalorder %s15, 1
      %p58 = por %p56, %p57
      %p59 = scmp.ne.s32.totalorder %s51, %s54
      %p60 = scmp.eq.s32.totalorder %s15, 0
      %p61 = por %p59, %p60
      %p62 = scmp.ne.s32.totalorder %s51, %s54
      %p63 = scmp.eq.s32.totalorder %s20, 1
      %p64 = por %p62, %p63
      %p65 = scmp.ne.s32.totalorder %s54, %s55
      %p66 = scmp.eq.s32.totalorder %s20, 0
      %p67 = por %p65, %p66
      %p68 = scmp.ne.s32.totalorder %s54, %s55
      %p69 = scmp.eq.s32.totalorder %s21, 1
      %p70 = por %p68, %p69
      %p72 = scmp.ne.s32.totalorder %s55, %s71
      %p73 = scmp.eq.s32.totalorder %s21, 0
      %p74 = por %p72, %p73
      %s76 = sadd.s32 %s75, 1
      %p79 = scmp.eq.s32.totalorder %s15, 1
      %p80 = scmp.ne.s32.totalorder %s75, %s77
      %p81 = scmp.eq.s32.totalorder %s15, 0
      %p82 = por %p80, %p81
      %p83 = scmp.ne.s32.totalorder %s75, %s77
      %p84 = scmp.eq.s32.totalorder %s20, 1
      %p85 = por %p83, %p84
      %p86 = scmp.ne.s32.totalorder %s77, %s78
      %p87 = scmp.eq.s32.totalorder %s20, 0
      %p88 = por %p86, %p87
      %p89 = scmp.ne.s32.totalorder %s77, %s78
      %p90 = scmp.eq.s32.totalorder %s21, 1
      %p91 = por %p89, %p90
      %p93 = scmp.ne.s32.totalorder %s78, %s92
      %p94 = scmp.eq.s32.totalorder %s21, 0
      %p95 = por %p93, %p94
      %s97 = sadd.s32 %s96, 1
      %p100 = scmp.eq.s32.totalorder %s15, 1
      %p101 = scmp.ne.s32.totalorder %s96, %s98
      %p102 = scmp.eq.s32.totalorder %s15, 0
      %p103 = por %p101, %p102
      %p104 = scmp.ne.s32.totalorder %s96, %s98
      %p105 = scmp.eq.s32.totalorder %s20, 1
      %p106 = por %p104, %p105
      %p107 = scmp.ne.s32.totalorder %s98, %s99
      %p108 = scmp.eq.s32.totalorder %s20, 0
      %p109 = por %p107, %p108
      %p110 = scmp.ne.s32.totalorder %s98, %s99
      %p111 = scmp.eq.s32.totalorder %s21, 1
      %p112 = por %p110, %p111
      %p114 = scmp.ne.s32.totalorder %s99, %s113
      %p115 = scmp.eq.s32.totalorder %s21, 0
      %p116 = por %p114, %p115
      %s117 = ssub.s32 %s15, %s22
      %p118 = scmp.eq.s32.totalorder %s117, 0
      %s120 = sadd.s32 %s119, 1
      %s121 = scalar_select %p118, %s119, %s120
      %p124 = pneg %p118
      %p125 = scmp.eq.s32.totalorder %s15, 1
      %p126 = por %p124, %p125
      %p127 = scmp.ne.s32.totalorder %s119, %s122
      %p128 = scmp.eq.s32.totalorder %s15, 0
      %p129 = por %p127, %p128
      %p130 = scmp.ne.s32.totalorder %s119, %s122
      %p131 = scmp.eq.s32.totalorder %s20, 1
      %p132 = por %p130, %p131
      %p133 = scmp.ne.s32.totalorder %s122, %s123
      %p134 = scmp.eq.s32.totalorder %s20, 0
      %p135 = por %p133, %p134
      %p136 = scmp.ne.s32.totalorder %s122, %s123
      %p137 = scmp.eq.s32.totalorder %s21, 1
      %p138 = por %p136, %p137
      %p140 = scmp.ne.s32.totalorder %s123, %s139
      %p141 = scmp.eq.s32.totalorder %s21, 0
      %p142 = por %p140, %p141
      %p143 = scmp.le.s32.totalorder 1, %s15
      %p144 = scmp.lt.s32.totalorder %s15, 3
      %p145 = pnand %p143, %p144
      %p146 = pneg %p145
      // Predicated region
      $region9: #{tpu_custom_call.1} parent=5 // pred_check
        _
      $region10: #{tpu_custom_call.1} parent=5 // pred_check_branch
        %148 = sbr.rel (%p145) target = $region12
      $region11: #{tpu_custom_call.1} parent=5 // pred_region
        %s149 = ssub.s32 %s15, 1
        // Predicated region
        $region13: #{tpu_custom_call.1} parent=11 // pred_check
          %p150 = pneg %p88
        $region14: #{tpu_custom_call.1} parent=11 // pred_check_branch
          %152 = sbr.rel (%p150) target = $region16
        $region15: #{tpu_custom_call.1} parent=11 // pred_region
          %s154 = ssub.s32 1024, 1024
          %155 = vsyncadd [#allocation3], %s154
          %s156 = sshll.u32 [#allocation2], 4
          %s157 = int_to_ptr.vmem [resolvable:$true] %s156
          %162 = dma.hbm_to_vmem [thread:$0]  %s2, 1024, %s157, [#allocation3], 128, 128, 8
        $region16: #{tpu_custom_call.1} parent=11 // pred_fallthru
          _
        // Predicated region
        $region17: #{tpu_custom_call.1} parent=11 // pred_check
          %p163 = pneg %p109
        $region18: #{tpu_custom_call.1} parent=11 // pred_check_branch
          %165 = sbr.rel (%p163) target = $region20
        $region19: #{tpu_custom_call.1} parent=11 // pred_region
          %s167 = ssub.s32 2560, 2560
          %168 = vsyncadd [#allocation6], %s167
          %s169 = sshll.u32 [#allocation5], 4
          %s170 = int_to_ptr.vmem [resolvable:$true] %s169
          %175 = dma.hbm_to_vmem [thread:$0]  %s3, 2560, %s170, [#allocation6], 128, 128, 8
        $region20: #{tpu_custom_call.1} parent=11 // pred_fallthru
          _
      $region12: #{tpu_custom_call.1} parent=5 // pred_fallthru
        _
      %p176 = scmp.lt.s32.totalorder %s15, 2
      // Predicated region
      $region21: #{tpu_custom_call.1} parent=5 // pred_check
        %p177 = pneg %p176
      $region22: #{tpu_custom_call.1} parent=5 // pred_check_branch
        %179 = sbr.rel (%p177) target = $region24
      $region23: #{tpu_custom_call.1} parent=5 // pred_region
        // Predicated region
        $region25: #{tpu_custom_call.1} parent=23 // pred_check
          %p180 = pneg %p35
        $region26: #{tpu_custom_call.1} parent=23 // pred_check_branch
          %182 = sbr.rel (%p180) target = $region28
        $region27: #{tpu_custom_call.1} parent=23 // pred_region
          %s183 = smul.u32 2, %s15
          %p184 = scmp.lt.s32.totalorder %s183, 3
          %s185 = scalar_select %p184, %s183, 3
          %s186 = smul.addr %s185, 8
          %s187 = scalar_lea.vmem %s0, %s186
          %s188 = smul.u32 2, %s15
        $region28: #{tpu_custom_call.1} parent=23 // pred_fallthru
          _
        // Predicated region
        $region29: #{tpu_custom_call.1} parent=23 // pred_check
          %p189 = pneg %p61
        $region30: #{tpu_custom_call.1} parent=23 // pred_check_branch
          %191 = sbr.rel (%p189) target = $region32
        $region31: #{tpu_custom_call.1} parent=23 // pred_region
          %s192 = smul.u32 2, %s15
          %p193 = scmp.lt.s32.totalorder %s192, 3
          %s194 = scalar_select %p193, %s192, 3
          %s195 = smul.addr %s194, 8
          %s196 = scalar_lea.vmem %s1, %s195
          %s197 = smul.u32 2, %s15
        $region32: #{tpu_custom_call.1} parent=23 // pred_fallthru
          _
      $region24: #{tpu_custom_call.1} parent=5 // pred_fallthru
        _
      %p198 = scmp.le.s32.totalorder 1, %s15
      %p199 = scmp.lt.s32.totalorder %s15, 3
      %p200 = pnand %p198, %p199
      %p201 = pneg %p200
      // Predicated region
      $region33: #{tpu_custom_call.1} parent=5 // pred_check
        _
      $region34: #{tpu_custom_call.1} parent=5 // pred_check_branch
        %203 = sbr.rel (%p200) target = $region36
      $region35: #{tpu_custom_call.1} parent=5 // pred_region
        %s204 = ssub.s32 %s15, 1
        // Predicated region
        $region37: #{tpu_custom_call.1} parent=35 // pred_check
          %p205 = pneg %p88
        $region38: #{tpu_custom_call.1} parent=35 // pred_check_branch
          %207 = sbr.rel (%p205) target = $region40
        $region39: #{tpu_custom_call.1} parent=35 // pred_region
          %208 = dma.done [#allocation3], 1024
        $region40: #{tpu_custom_call.1} parent=35 // pred_fallthru
          _
        // Predicated region
        $region41: #{tpu_custom_call.1} parent=35 // pred_check
          %p209 = pneg %p109
        $region42: #{tpu_custom_call.1} parent=35 // pred_check_branch
          %211 = sbr.rel (%p209) target = $region44
        $region43: #{tpu_custom_call.1} parent=35 // pred_region
          %212 = dma.done [#allocation6], 2560
        $region44: #{tpu_custom_call.1} parent=35 // pred_fallthru
          _
        %s213 = smul.u32 2, %s20
        %p214 = scmp.lt.s32.totalorder %s213, 3
        %s215 = scalar_select %p214, %s213, 3
        %s216 = smul.addr %s215, 8
        %s217 = scalar_lea.vmem %s0, %s216
        %p218 = pneg %p41
        %p219 = pneg %p38
        %s220 = smul.u32 2, %s20
        %p221 = scmp.lt.s32.totalorder %s220, 3
        %s222 = scalar_select %p221, %s220, 3
        %s223 = smul.addr %s222, 8
        %s224 = scalar_lea.vmem %s1, %s223
        %p225 = pneg %p67
        %p226 = pneg %p64
        %p227 = pneg %p88
        %p228 = pneg %p85
        %p229 = pneg %p109
        %p230 = pneg %p106
        %p231 = pneg %p135
        %p232 = pneg %p132
        %s233 = sand.u32 %s122, 1
        %s234 = scalar_lea.sflag [#allocation4], %s233
        %s235 = sand.u32 %s122, 1
        %s236 = smul.addr %s235, 16
        %s237 = scalar_lea.vmem [#allocation7], %s236
        %s238 = smul.u32 2, %s20
        %p239 = scmp.lt.s32.totalorder %s238, 3
        %s240 = scalar_select %p239, %s238, 3
        %s241 = smul.addr %s240, 8
        %s242 = scalar_lea.vmem %s0, %s241
        %s243 = smul.u32 2, %s20
        %s244 = smul.u32 2, %s20
        %p245 = scmp.lt.s32.totalorder %s244, 3
        %s246 = scalar_select %p245, %s244, 3
        %s247 = smul.addr %s246, 8
        %s248 = scalar_lea.vmem %s1, %s247
        %s249 = smul.u32 2, %s20
        %s250 = smul.u32 2, %s20
        %v251 = vld [vmem:[%s242] sm:$0xff]
        %v252 = vld [vmem:[%s242 + $0x8] sm:$0xff]
        %v253 = vld [vmem:[%s248] sm:$0xff]
        %v254 = vld [vmem:[%s248 + $0x8] sm:$0xff]
        %v255 = vld [vmem:[#allocation2] sm:$0xff]
        %v256 = vld [vmem:[#allocation2 + $0x8] sm:$0xff]
        %v257 = vld [vmem:[#allocation2 + $0x10] sm:$0xff]
        %v258 = vld [vmem:[#allocation2 + $0x18] sm:$0xff]
        %v259 = vld [vmem:[#allocation2 + $0x20] sm:$0xff]
        %v260 = vld [vmem:[#allocation2 + $0x28] sm:$0xff]
        %v261 = vld [vmem:[#allocation2 + $0x30] sm:$0xff]
        %v262 = vld [vmem:[#allocation2 + $0x38] sm:$0xff]
        %v263 = vlaneseq
        %v264 = vand.u32 %v263, 127
        %v265 = vadd.s32 %v264, 128
        %266 = vset.pattern.permute.xlu0 0
        %267 = vperm.xlu0 %266, %v253
        %v268 = vpop.permute.xlu0 %267
        %269 = vset.pattern.permute.xlu0 0
        %270 = vperm.xlu0 %269, %v254
        %v271 = vpop.permute.xlu0 %270
        %vm272 = vcmp.eq.s32.totalorder %v264, %v268
        %vm273 = vcmp.eq.s32.totalorder %v265, %v268
        %vm274 = vcmp.eq.s32.totalorder %v264, %v271
        %vm275 = vcmp.eq.s32.totalorder %v265, %v271
        %v276 = vsel %vm272, 1, 0
        %v277 = vsel %vm273, 1, 0
        %v278 = vsel %vm274, 1, 0
        %v279 = vsel %vm275, 1, 0
        %v280 = vcvt.s32.f32 %v276
        %v281 = vcvt.s32.f32 %v277
        %v282 = vcvt.s32.f32 %v278
        %v283 = vcvt.s32.f32 %v279
        %v284 = vadd.s32 %v253, 40
        %v285 = vadd.s32 %v254, 40
        %286 = vset.pattern.permute.xlu0 1
        %287 = vperm.xlu0 %286, %v284
        %v288 = vpop.permute.xlu0 %287
        %289 = vset.pattern.permute.xlu0 1
        %290 = vperm.xlu0 %289, %v285
        %v291 = vpop.permute.xlu0 %290
        %vm292 = vcmp.eq.s32.totalorder %v264, %v288
        %vm293 = vcmp.eq.s32.totalorder %v265, %v288
        %vm294 = vcmp.eq.s32.totalorder %v264, %v291
        %vm295 = vcmp.eq.s32.totalorder %v265, %v291
        %v296 = vsel %vm292, 1, 0
        %v297 = vsel %vm293, 1, 0
        %v298 = vsel %vm294, 1, 0
        %v299 = vsel %vm295, 1, 0
        %v300 = vcvt.s32.f32 %v296
        %v301 = vcvt.s32.f32 %v297
        %v302 = vcvt.s32.f32 %v298
        %v303 = vcvt.s32.f32 %v299
        %v304 = vadd.f32 %v280, %v300
        %v305 = vadd.f32 %v281, %v301
        %v306 = vadd.f32 %v282, %v302
        %v307 = vadd.f32 %v283, %v303
        %v308 = vadd.s32 %v253, 80
        %v309 = vadd.s32 %v254, 80
        %310 = vset.pattern.permute.xlu0 2
        %311 = vperm.xlu0 %310, %v308
        %v312 = vpop.permute.xlu0 %311
        %313 = vset.pattern.permute.xlu0 2
        %314 = vperm.xlu0 %313, %v309
        %v315 = vpop.permute.xlu0 %314
        %vm316 = vcmp.eq.s32.totalorder %v264, %v312
        %vm317 = vcmp.eq.s32.totalorder %v265, %v312
        %vm318 = vcmp.eq.s32.totalorder %v264, %v315
        %vm319 = vcmp.eq.s32.totalorder %v265, %v315
        %v320 = vsel %vm316, 1, 0
        %v321 = vsel %vm317, 1, 0
        %v322 = vsel %vm318, 1, 0
        %v323 = vsel %vm319, 1, 0
        %v324 = vcvt.s32.f32 %v320
        %v325 = vcvt.s32.f32 %v321
        %v326 = vcvt.s32.f32 %v322
        %v327 = vcvt.s32.f32 %v323
        %v328 = vadd.f32 %v304, %v324
        %v329 = vadd.f32 %v305, %v325
        %v330 = vadd.f32 %v306, %v326
        %v331 = vadd.f32 %v307, %v327
        %v332 = vadd.s32 %v253, 120
        %v333 = vadd.s32 %v254, 120
        %334 = vset.pattern.permute.xlu0 3
        %335 = vperm.xlu0 %334, %v332
        %v336 = vpop.permute.xlu0 %335
        %337 = vset.pattern.permute.xlu0 3
        %338 = vperm.xlu0 %337, %v333
        %v339 = vpop.permute.xlu0 %338
        %vm340 = vcmp.eq.s32.totalorder %v264, %v336
        %vm341 = vcmp.eq.s32.totalorder %v265, %v336
        %vm342 = vcmp.eq.s32.totalorder %v264, %v339
        %vm343 = vcmp.eq.s32.totalorder %v265, %v339
        %v344 = vsel %vm340, 1, 0
        %v345 = vsel %vm341, 1, 0
        %v346 = vsel %vm342, 1, 0
        %v347 = vsel %vm343, 1, 0
        %v348 = vcvt.s32.f32 %v344
        %v349 = vcvt.s32.f32 %v345
        %v350 = vcvt.s32.f32 %v346
        %v351 = vcvt.s32.f32 %v347
        %v352 = vadd.f32 %v328, %v348
        %v353 = vadd.f32 %v329, %v349
        %v354 = vadd.f32 %v330, %v350
        %v355 = vadd.f32 %v331, %v351
        %v356 = vld [vmem:[#allocation5] sm:$0xff]
        %v357 = vld [vmem:[#allocation5 + $0x8] sm:$0xff]
        %v358 = vld [vmem:[#allocation5 + $0x10] sm:$0xff]
        %v359 = vld [vmem:[#allocation5 + $0x18] sm:$0xff]
        %v360 = vld [vmem:[#allocation5 + $0x20] sm:$0xff]
        %v361 = vld [vmem:[#allocation5 + $0x28] sm:$0xff]
        %v362 = vld [vmem:[#allocation5 + $0x30] sm:$0xff]
        %v363 = vld [vmem:[#allocation5 + $0x38] sm:$0xff]
        %v364 = vld [vmem:[#allocation5 + $0x40] sm:$0xff]
        %v365 = vld [vmem:[#allocation5 + $0x48] sm:$0xff]
        %v366 = vld [vmem:[#allocation5 + $0x50] sm:$0xff]
        %v367 = vld [vmem:[#allocation5 + $0x58] sm:$0xff]
        %v368 = vld [vmem:[#allocation5 + $0x60] sm:$0xff]
        %v369 = vld [vmem:[#allocation5 + $0x68] sm:$0xff]
        %v370 = vld [vmem:[#allocation5 + $0x70] sm:$0xff]
        %v371 = vld [vmem:[#allocation5 + $0x78] sm:$0xff]
        %v372 = vld [vmem:[#allocation5 + $0x80] sm:$0xff]
        %v373 = vld [vmem:[#allocation5 + $0x88] sm:$0xff]
        %v374 = vld [vmem:[#allocation5 + $0x90] sm:$0xff]
        %v375 = vld [vmem:[#allocation5 + $0x98] sm:$0xff]
        %vm376 = vcmask 261120
        %v378 = vsel %vm376, %v353, 0
        %v381 = vsel %vm376, %v355, 0
        %383 = vmatprep.subr.mxu0 0.0
        %384 = vmatpush1.msra.mxu0 %v371
        %385 = vmatprep.subr.mxu0 0.0
        %386 = vmatpush1.msra.mxu0 %v370
        %387 = vmatprep.subr.mxu0 0.0
        %388 = vmatpush1.msra.mxu0 %v369
        %389 = vmatprep.subr.mxu0 0.0
        %390 = vmatpush1.msra.mxu0 %v368
        %391 = vmatprep.subr.mxu0 0.0
        %392 = vmatpush1.msra.mxu0 %v367
        %393 = vmatprep.subr.mxu0 0.0
        %394 = vmatpush1.msra.mxu0 %v366
        %395 = vmatprep.subr.mxu0 0.0
        %396 = vmatpush1.msra.mxu0 %v365
        %397 = vmatprep.subr.mxu0 0.0
        %398 = vmatpush1.msra.mxu0 %v364
        %399 = vmatprep.subr.mxu0 0.0
        %400 = vmatpush1.msra.mxu0 %v363
        %401 = vmatprep.subr.mxu0 0.0
        %402 = vmatpush1.msra.mxu0 %v362
        %403 = vmatprep.subr.mxu0 0.0
        %404 = vmatpush1.msra.mxu0 %v361
        %405 = vmatprep.subr.mxu0 0.0
        %406 = vmatpush1.msra.mxu0 %v360
        %407 = vmatprep.subr.mxu0 0.0
        %408 = vmatpush1.msra.mxu0 %v359
        %409 = vmatprep.subr.mxu0 0.0
        %410 = vmatpush1.msra.mxu0 %v358
        %411 = vmatprep.subr.mxu0 0.0
        %412 = vmatpush1.msra.mxu0 %v357
        %413 = vmatprep.subr.mxu0 0.0
        %414 = vmatpush1.msra.mxu0 %v356
        %415 = vmatprep.subr.mxu0 0.0
        %416 = vmatpush2.msra.mxu0 0.0
        %417 = vmatprep.subr.mxu0 0.0
        %418 = vmatpush2.msra.mxu0 0.0
        %419 = vmatprep.subr.mxu0 0.0
        %420 = vmatpush2.msra.mxu0 0.0
        %421 = vmatprep.subr.mxu0 0.0
        %422 = vmatpush2.msra.mxu0 0.0
        %423 = vmatprep.subr.mxu0 0.0
        %424 = vmatpush2.msra.mxu0 0.0
        %425 = vmatprep.subr.mxu0 0.0
        %426 = vmatpush2.msra.mxu0 0.0
        %427 = vmatprep.subr.mxu0 0.0
        %428 = vmatpush2.msra.mxu0 0.0
        %429 = vmatprep.subr.mxu0 0.0
        %430 = vmatpush2.msra.mxu0 0.0
        %431 = vmatprep.subr.mxu0 0.0
        %432 = vmatpush2.msra.mxu0 0.0
        %433 = vmatprep.subr.mxu0 0.0
        %434 = vmatpush2.msra.mxu0 0.0
        %435 = vmatprep.subr.mxu0 0.0
        %436 = vmatpush2.msra.mxu0 0.0
        %437 = vmatprep.subr.mxu0 0.0
        %438 = vmatpush2.msra.mxu0 0.0
        %439 = vmatprep.subr.mxu0 0.0
        %440 = vmatpush2.msra.mxu0 %v375
        %441 = vmatprep.subr.mxu0 0.0
        %442 = vmatpush2.msra.mxu0 %v374
        %443 = vmatprep.subr.mxu0 0.0
        %444 = vmatpush2.msra.mxu0 %v373
        %445 = vmatprep.subr.mxu0 0.0
        %446 = vmatpush2.msra.mxu0 %v372
        %447 = vmatprep.mubr.f32.mxu0 %v378
        %448 = vmatmul.mubr.f32.gmra.mxu0 %v352
        %v449 = vpop.f32.mrf.mxu0
        %v450 = vadd.f32 0.0, %v449
        %v451 = vpop.f32.mrf.mxu0
        %452 = vmatprep.mubr.f32.mxu0 %v381
        %453 = vmatmul.mubr.f32.gmra.mxu0 %v354
        %v454 = vpop.f32.mrf.mxu0
        %v455 = vadd.f32 0.0, %v454
        %v456 = vpop.f32.mrf.mxu0
        %457 = vdwg.mxu0
        %vm458 = vcmask 523264
        %v460 = vsel %vm458, %v251, 0
        %v463 = vsel %vm458, %v252, 0
        %465 = vmatprep.subr.mxu0 0.0
        %466 = vmatpush1.msra.mxu0 0.0
        %467 = vmatprep.subr.mxu0 0.0
        %468 = vmatpush1.msra.mxu0 0.0
        %469 = vmatprep.subr.mxu0 0.0
        %470 = vmatpush1.msra.mxu0 0.0
        %471 = vmatprep.subr.mxu0 0.0
        %472 = vmatpush1.msra.mxu0 0.0
        %473 = vmatprep.subr.mxu0 0.0
        %474 = vmatpush1.msra.mxu0 0.0
        %475 = vmatprep.subr.mxu0 0.0
        %476 = vmatpush1.msra.mxu0 0.0
        %477 = vmatprep.subr.mxu0 0.0
        %478 = vmatpush1.msra.mxu0 0.0
        %479 = vmatprep.subr.mxu0 0.0
        %480 = vmatpush1.msra.mxu0 0.0
        %481 = vmatprep.subr.mxu0 0.0
        %482 = vmatpush1.msra.mxu0 %v262
        %483 = vmatprep.subr.mxu0 0.0
        %484 = vmatpush1.msra.mxu0 %v261
        %485 = vmatprep.subr.mxu0 0.0
        %486 = vmatpush1.msra.mxu0 %v260
        %487 = vmatprep.subr.mxu0 0.0
        %488 = vmatpush1.msra.mxu0 %v259
        %489 = vmatprep.subr.mxu0 0.0
        %490 = vmatpush1.msra.mxu0 %v258
        %491 = vmatprep.subr.mxu0 0.0
        %492 = vmatpush1.msra.mxu0 %v257
        %493 = vmatprep.subr.mxu0 0.0
        %494 = vmatpush1.msra.mxu0 %v256
        %495 = vmatprep.subr.mxu0 0.0
        %496 = vmatpush1.msra.mxu0 %v255
        %497 = vmatprep.subr.mxu0 0.0
        %498 = vmatpush2.msra.mxu0 0.0
        %499 = vmatprep.subr.mxu0 0.0
        %500 = vmatpush2.msra.mxu0 0.0
        %501 = vmatprep.subr.mxu0 0.0
        %502 = vmatpush2.msra.mxu0 0.0
        %503 = vmatprep.subr.mxu0 0.0
        %504 = vmatpush2.msra.mxu0 0.0
        %505 = vmatprep.subr.mxu0 0.0
        %506 = vmatpush2.msra.mxu0 0.0
        %507 = vmatprep.subr.mxu0 0.0
        %508 = vmatpush2.msra.mxu0 0.0
        %509 = vmatprep.subr.mxu0 0.0
        %510 = vmatpush2.msra.mxu0 0.0
        %511 = vmatprep.subr.mxu0 0.0
        %512 = vmatpush2.msra.mxu0 0.0
        %513 = vmatprep.subr.mxu0 0.0
        %514 = vmatpush2.msra.mxu0 0.0
        %515 = vmatprep.subr.mxu0 0.0
        %516 = vmatpush2.msra.mxu0 0.0
        %517 = vmatprep.subr.mxu0 0.0
        %518 = vmatpush2.msra.mxu0 0.0
        %519 = vmatprep.subr.mxu0 0.0
        %520 = vmatpush2.msra.mxu0 0.0
        %521 = vmatprep.subr.mxu0 0.0
        %522 = vmatpush2.msra.mxu0 0.0
        %523 = vmatprep.subr.mxu0 0.0
        %524 = vmatpush2.msra.mxu0 0.0
        %525 = vmatprep.subr.mxu0 0.0
        %526 = vmatpush2.msra.mxu0 0.0
        %527 = vmatprep.subr.mxu0 0.0
        %528 = vmatpush2.msra.mxu0 0.0
        %529 = vmatprep.mubr.f32.mxu0 0.0
        %530 = vmatmul.mubr.f32.gmra.mxu0 %v460
        %v531 = vpop.f32.mrf.mxu0
        %v532 = vadd.f32 %v450, %v531
        %v533 = vpop.f32.mrf.mxu0
        %534 = vmatprep.mubr.f32.mxu0 0.0
        %535 = vmatmul.mubr.f32.gmra.mxu0 %v463
        %v536 = vpop.f32.mrf.mxu0
        %v537 = vadd.f32 %v455, %v536
        %v538 = vpop.f32.mrf.mxu0
        %539 = vdwg.mxu0
        %540 = vst [vmem:[%s237] sm:$0xff] %v532
        %541 = vst [vmem:[%s237 + $0x8] sm:$0xff] %v537
        %s542 = sand.u32 %s122, 1
        %s543 = scalar_lea.sflag [#allocation4], %s542
        %s544 = sand.u32 %s122, 1
        %s545 = smul.addr %s544, 16
        %s546 = scalar_lea.vmem [#allocation7], %s545
        // Predicated region
        $region45: #{tpu_custom_call.1} parent=35 // pred_check
          %p547 = pneg %p132
        $region46: #{tpu_custom_call.1} parent=35 // pred_check_branch
          %549 = sbr.rel (%p547) target = $region48
        $region47: #{tpu_custom_call.1} parent=35 // pred_region
          %s550 = smul.u32 2, %s20
          %s552 = ssub.s32 256, 256
          %553 = vsyncadd %s543, %s552
          %s554 = smul.addr %s550, 128
          %s555 = scalar_lea.hbm %s4, %s554
          %s556 = sshll.u32 %s546, 4
          %s557 = int_to_ptr.vmem [resolvable:$true] %s556
          %562 = dma.vmem_to_hbm [thread:$0]  %s557, 256, %s555, %s543, 128, 128, 8
        $region48: #{tpu_custom_call.1} parent=35 // pred_fallthru
          _
      $region36: #{tpu_custom_call.1} parent=5 // pred_fallthru
        _
      %p563 = scmp.le.s32.totalorder 2, %s15
      // Predicated region
      $region49: #{tpu_custom_call.1} parent=5 // pred_check
        %p564 = pneg %p563
      $region50: #{tpu_custom_call.1} parent=5 // pred_check_branch
        %566 = sbr.rel (%p564) target = $region52
      $region51: #{tpu_custom_call.1} parent=5 // pred_region
        %s567 = ssub.s32 %s15, 2
        // Predicated region
        $region53: #{tpu_custom_call.1} parent=51 // pred_check
          %p568 = pneg %p138
        $region54: #{tpu_custom_call.1} parent=51 // pred_check_branch
          %570 = sbr.rel (%p568) target = $region56
        $region55: #{tpu_custom_call.1} parent=51 // pred_region
          %s571 = sand.u32 %s123, 1
          %s572 = scalar_lea.sflag [#allocation4], %s571
          %s573 = sand.u32 %s123, 1
          %s574 = smul.addr %s573, 16
          %s575 = scalar_lea.vmem [#allocation7], %s574
          %576 = dma.done %s572, 256
        $region56: #{tpu_custom_call.1} parent=51 // pred_fallthru
          _
      $region52: #{tpu_custom_call.1} parent=5 // pred_fallthru
        _
    $region6: #{tpu_custom_call.1} parent=1 // loop_footer
      %s19 = sadd.s32 1, %s15
    $region7: #{tpu_custom_call.1} parent=1 // loop_footer_branch
      %14 = sbr.rel target = $region3
    $region8: #{tpu_custom_call.1} parent=1 // loop_exit
      _
    %577 = vsyncpa [#allocation3], 1
    %s578 = scalar_lea.sflag [#allocation3], 1
    %579 = vsyncpa %s578, 1
    %580 = vsyncpa [#allocation6], 1
    %581 = vsyncpa [#allocation4], 1
    %s582 = scalar_lea.sflag [#allocation4], 1
    %583 = vsyncpa %s582, 1

</llo_original>
